<compile_context>
chip_gen: v6e
topology: v6e:2x2x1
jax: 0.10.0
libtpu: 0.0.40
codegen_flags: <defaults>
</compile_context>

<pallas_src>
import jax
import jax.numpy as jnp
from jax.experimental import pallas as pl
from jax.experimental.pallas import tpu as pltpu

IN_FEATURES = 16 * 5 * 5     # 400
OUT_FEATURES = 120
OUT_PADDED = 128             # lane-dense output slab (120 -> 128 lanes)


def linear_relu_kernel(x_ref, w_ref, b_ref, o_ref):
    """o = relu(x @ w + b) for one row tile.

    x_ref: (TM, 400)    activation row tile
    w_ref: (400, 128)   K-major weight (PyTorch W.T, zero-padded 120->128)
    b_ref: (1, 128)     bias (zero-padded 120->128)
    o_ref: (TM, 128)    lane-dense output slab
    """
    acc = jnp.dot(x_ref[...], w_ref[...], preferred_element_type=jnp.float32)
    o_ref[...] = jnp.maximum(acc + b_ref[...], 0.0).astype(o_ref.dtype)


def _round_up(n, m):
    return (n + m - 1) // m * m


def layer4_forward(x, w, b, *, row_tile=128):
    """PyTorch-equivalent forward: F.relu(nn.Linear(400, 120)(x)).

    x: (N, 400), w: (120, 400) PyTorch layout, b: (120,)
    """
    N = x.shape[0]

    # ---- parameter prep (once, outside the kernel; XLA folds it) ----------
    # K-major weight (400, 120) padded to 128 output lanes; padded bias.
    w_km = jnp.zeros((IN_FEATURES, OUT_PADDED), dtype=w.dtype)
    w_km = w_km.at[:, :OUT_FEATURES].set(w.T)
    b_pad = jnp.zeros((1, OUT_PADDED), dtype=b.dtype)
    b_pad = b_pad.at[0, :OUT_FEATURES].set(b)

    # ---- row tiling --------------------------------------------------------
    if N <= row_tile:
        tm = max(8, _round_up(N, 8))      # single tile, sublane-aligned
        n_pad = tm
    else:
        tm = row_tile                     # 128 rows / grid step
        n_pad = _round_up(N, tm)
    x_pad = x if n_pad == N else jnp.pad(x, ((0, n_pad - N), (0, 0)))

    grid = (n_pad // tm,)
    out = pl.pallas_call(
        linear_relu_kernel,
        out_shape=jax.ShapeDtypeStruct((n_pad, OUT_PADDED), x.dtype),
        grid=grid,
        in_specs=[
            # activations: one row tile per grid step
            pl.BlockSpec((tm, IN_FEATURES), lambda i: (i, 0)),
            # weight / bias: constant index_map -> DMA'd once, VMEM-resident
            pl.BlockSpec((IN_FEATURES, OUT_PADDED), lambda i: (0, 0)),
            pl.BlockSpec((1, OUT_PADDED), lambda i: (0, 0)),
        ],
        out_specs=pl.BlockSpec((tm, OUT_PADDED), lambda i: (i, 0)),
        compiler_params=pltpu.CompilerParams(
            dimension_semantics=("parallel",)),   # shard row tiles across v7x TCs
    )(x_pad, w_km, b_pad)

    # Strip row padding and the 8 zero lanes.
    return out[:N, :OUT_FEATURES]


def reference_forward(x, w, b):
    return jnp.maximum(x @ w.T + b.reshape(1, -1), 0.0)


if __name__ == "__main__":
    key = jax.random.PRNGKey(0)
    kx, kw, kb = jax.random.split(key, 3)

    # layer4 input: flattened conv features (N, 16*5*5) -> output (N, 120)
    N = 8
    x = jax.random.normal(kx, (N, IN_FEATURES), dtype=jnp.float32)

    # Deterministic synthetic parameters, scaled like PyTorch's default
    # uniform(-1/sqrt(fan_in), 1/sqrt(fan_in)) init for nn.Linear(400, 120).
    bound = 1.0 / (IN_FEATURES ** 0.5)
    w = jax.random.uniform(kw, (OUT_FEATURES, IN_FEATURES), jnp.float32, -bound, bound)
    b = jax.random.uniform(kb, (OUT_FEATURES,), jnp.float32, -bound, bound)

    # Small-batch path (single tile).
    out = jax.block_until_ready(layer4_forward(x, w, b))
    ref = reference_forward(x, w, b)
    assert out.shape == (N, OUT_FEATURES), out.shape
    assert jnp.allclose(out, ref, atol=1e-4, rtol=1e-4), "mismatch vs reference (N=8)"

    # Larger batch exercising the grid-over-N / row-padding path.
    N2 = 300
    x2 = jax.random.normal(kx, (N2, IN_FEATURES), dtype=jnp.float32)
    out2 = jax.block_until_ready(layer4_forward(x2, w, b))
    ref2 = reference_forward(x2, w, b)
    assert out2.shape == (N2, OUT_FEATURES), out2.shape
    assert jnp.allclose(out2, ref2, atol=1e-4, rtol=1e-4), "mismatch vs reference (N=300)"

    print("KERNEL_OK")
</pallas_src>

<mosaic_0001>
module attributes {stable_mosaic.version = 11 : i64} {
  func.func @linear_relu_kernel(%arg0: i32, %arg1: memref<8x400xf32, #tpu.memory_space<vmem>>, %arg2: memref<400x128xf32, #tpu.memory_space<vmem>>, %arg3: memref<1x128xf32, #tpu.memory_space<vmem>>, %arg4: memref<8x128xf32, #tpu.memory_space<vmem>>) attributes {dimension_semantics = [#tpu.dimension_semantics<parallel>], iteration_bounds = array<i64: 1>, scalar_prefetch = 0 : i64, scratch_operands = 0 : i64, tpu.core_type = #tpu.core_type<tc>, window_params = [{transform_indices = @transform_0, window_bounds = array<i64: 8, 400>}, {pipeline_mode = #tpu.pipeline_mode<synchronous>, transform_indices = @transform_1, window_bounds = array<i64: 400, 128>}, {pipeline_mode = #tpu.pipeline_mode<synchronous>, transform_indices = @transform_2, window_bounds = array<i64: 1, 128>}, {transform_indices = @transform_3, window_bounds = array<i64: 8, 128>}]} {
    %c0 = arith.constant 0 : index
    %c0_0 = arith.constant 0 : index
    %0 = vector.load %arg1[%c0, %c0_0] : memref<8x400xf32, #tpu.memory_space<vmem>>, vector<8x400xf32>
    %c0_1 = arith.constant 0 : index
    %c0_2 = arith.constant 0 : index
    %1 = vector.load %arg2[%c0_1, %c0_2] : memref<400x128xf32, #tpu.memory_space<vmem>>, vector<400x128xf32>
    %cst = arith.constant dense<0.000000e+00> : vector<8x128xf32>
    %2 = tpu.matmul %0, %1, %cst {dimension_numbers = #tpu.dot_dimension_numbers<[1], [0], [0], [1], [0, 0, 1, 1], [], []>} : vector<8x400xf32>, vector<400x128xf32>, vector<8x128xf32> -> vector<8x128xf32>
    %c0_3 = arith.constant 0 : index
    %c0_4 = arith.constant 0 : index
    %3 = vector.load %arg3[%c0_3, %c0_4] : memref<1x128xf32, #tpu.memory_space<vmem>>, vector<1x128xf32>
    %4 = vector.broadcast %3 : vector<1x128xf32> to vector<8x128xf32>
    %5 = arith.addf %2, %4 : vector<8x128xf32>
    %cst_5 = arith.constant 0.000000e+00 : f32
    %6 = vector.broadcast %cst_5 : f32 to vector<8x128xf32>
    %7 = arith.maximumf %5, %6 : vector<8x128xf32>
    %c0_6 = arith.constant 0 : index
    %c0_7 = arith.constant 0 : index
    %8 = vector.load %arg4[%c0_6, %c0_7] : memref<8x128xf32, #tpu.memory_space<vmem>>, vector<8x128xf32>
    tpu.vector_store %arg4[%c0_6, %c0_7], %7 {strides = array<i32>} : memref<8x128xf32, #tpu.memory_space<vmem>>, vector<8x128xf32>,
    return
  }
  func.func @transform_0(%arg0: i32) -> (i32, i32) {
    %c0_i32 = arith.constant 0 : i32
    %c0_i32_0 = arith.constant 0 : i32
    return %arg0, %c0_i32 : i32, i32
  }
  func.func @transform_1(%arg0: i32) -> (i32, i32) {
    %c0_i32 = arith.constant 0 : i32
    %c0_i32_0 = arith.constant 0 : i32
    %c0_i32_1 = arith.constant 0 : i32
    return %c0_i32, %c0_i32_0 : i32, i32
  }
  func.func @transform_2(%arg0: i32) -> (i32, i32) {
    %c0_i32 = arith.constant 0 : i32
    %c0_i32_0 = arith.constant 0 : i32
    %c0_i32_1 = arith.constant 0 : i32
    return %c0_i32, %c0_i32_0 : i32, i32
  }
  func.func @transform_3(%arg0: i32) -> (i32, i32) {
    %c0_i32 = arith.constant 0 : i32
    %c0_i32_0 = arith.constant 0 : i32
    return %arg0, %c0_i32 : i32, i32
  }
}

</mosaic_0001>

<llo_original>
// kernel: tpu_custom_call.1
$region0: #{tpu_custom_call.1}
  #allocation0 [shape = 'u32[]', space=smem, size = 0x4, offset = 0x4, fixed_abs, tag = 'smem constant byte address 0x4 - core index']
  #allocation1 [shape = 'u32[144,128]{1,0:T(1,128)}', space=vmem, size = 0x12000, scoped, tag = 'internal scratch']
  %s0 = inlined_call_operand.hbm [shape: f32[8,400], index: 0, kind: input, shape index: {}]
  %s1 = inlined_call_operand.hbm [shape: f32[400,128], index: 1, kind: input, shape index: {}]
  %s2 = inlined_call_operand.vmem [shape: f32[1,128], index: 2, kind: input, shape index: {}]
  %s3 = inlined_call_operand.hbm [shape: f32[8,128], index: 3, kind: output, shape index: {}]
  %s4 = sld [smem:[#allocation0]]
  $region30: #{tpu_custom_call.1} parent=0
    _
  %s6 = ssub.s32 1, %s4
  %s7 = scalar_select 0, %s6, %s4
  $region1: #{tpu_custom_call.1} parent=0
    #allocation2 [shape = 'u8[16384]{0}', space=vmem, size = 0x4000, scoped, tag = 'input window, operand 0, single buffered']
    #allocation3 [shape = 's32[1]{0}', space=sflag, size = 0x4, scoped, tag = 'scoped memory for tpu_custom_call.1']
    #allocation4 [shape = 's32[1]{0}', space=sflag, size = 0x4, scoped, tag = 'scoped memory for tpu_custom_call.1']
    #allocation5 [shape = 'u8[204800]{0}', space=vmem, size = 0x32000, scoped, tag = 'input window, operand 1, single buffered']
    #allocation6 [shape = 's32[1]{0}', space=sflag, size = 0x4, scoped, tag = 'scoped memory for tpu_custom_call.1']
    #allocation7 [shape = 'u8[4096]{0}', space=vmem, size = 0x1000, scoped, tag = 'output window, operand 0, single buffered']
    %8 = vsyncpa [#allocation3], 0
    %9 = vsyncpa [#allocation6], 0
    %10 = vsyncpa [#allocation4], 0
    // Predicated region
    $region2: #{tpu_custom_call.1} parent=1 // pred_check
      _
    $region3: #{tpu_custom_call.1} parent=1 // pred_check_branch
      %12 = sbr.rel (0) target = $region5
    $region4: #{tpu_custom_call.1} parent=1 // pred_region
      %s14 = ssub.s32 512, 512
      %15 = vsyncadd [#allocation3], %s14
      %s17 = sshll.u32 [#allocation2], 4
      %s18 = int_to_ptr.vmem [resolvable:$true] %s17
      %20 = dma.hbm_to_vmem [thread:$0]  %s0, 512, %s18, [#allocation3]
    $region5: #{tpu_custom_call.1} parent=1 // pred_fallthru
      _
    // Predicated region
    $region6: #{tpu_custom_call.1} parent=1 // pred_check
      _
    $region7: #{tpu_custom_call.1} parent=1 // pred_check_branch
      %22 = sbr.rel (0) target = $region9
    $region8: #{tpu_custom_call.1} parent=1 // pred_region
      %s24 = ssub.s32 6400, 6400
      %25 = vsyncadd [#allocation6], %s24
      %s26 = sshll.u32 [#allocation5], 4
      %s27 = int_to_ptr.vmem [resolvable:$true] %s26
      %32 = dma.hbm_to_vmem [thread:$0]  %s1, 6400, %s27, [#allocation6], 128, 128, 8
    $region9: #{tpu_custom_call.1} parent=1 // pred_fallthru
      _
    // Predicated region
    $region10: #{tpu_custom_call.1} parent=1 // pred_check
      _
    $region11: #{tpu_custom_call.1} parent=1 // pred_check_branch
      %34 = sbr.rel (0) target = $region13
    $region12: #{tpu_custom_call.1} parent=1 // pred_region
      _
    $region13: #{tpu_custom_call.1} parent=1 // pred_fallthru
      _
    // Predicated region
    $region14: #{tpu_custom_call.1} parent=1 // pred_check
      _
    $region15: #{tpu_custom_call.1} parent=1 // pred_check_branch
      %36 = sbr.rel (0) target = $region17
    $region16: #{tpu_custom_call.1} parent=1 // pred_region
      %37 = dma.done [#allocation3], 512
    $region17: #{tpu_custom_call.1} parent=1 // pred_fallthru
      _
    // Predicated region
    $region18: #{tpu_custom_call.1} parent=1 // pred_check
      _
    $region19: #{tpu_custom_call.1} parent=1 // pred_check_branch
      %39 = sbr.rel (0) target = $region21
    $region20: #{tpu_custom_call.1} parent=1 // pred_region
      %40 = dma.done [#allocation6], 6400
    $region21: #{tpu_custom_call.1} parent=1 // pred_fallthru
      _
    %v41 = vld [vmem:[#allocation2] sm:$0xff]
    %v42 = vld [vmem:[#allocation2 + $0x8] sm:$0xff]
    %v43 = vld [vmem:[#allocation2 + $0x10] sm:$0xff]
    %v44 = vld [vmem:[#allocation2 + $0x18] sm:$0xff]
    %v45 = vld [vmem:[#allocation5] sm:$0xff]
    %v46 = vld [vmem:[#allocation5 + $0x8] sm:$0xff]
    %v47 = vld [vmem:[#allocation5 + $0x10] sm:$0xff]
    %v48 = vld [vmem:[#allocation5 + $0x18] sm:$0xff]
    %v49 = vld [vmem:[#allocation5 + $0x20] sm:$0xff]
    %v50 = vld [vmem:[#allocation5 + $0x28] sm:$0xff]
    %v51 = vld [vmem:[#allocation5 + $0x30] sm:$0xff]
    %v52 = vld [vmem:[#allocation5 + $0x38] sm:$0xff]
    %v53 = vld [vmem:[#allocation5 + $0x40] sm:$0xff]
    %v54 = vld [vmem:[#allocation5 + $0x48] sm:$0xff]
    %v55 = vld [vmem:[#allocation5 + $0x50] sm:$0xff]
    %v56 = vld [vmem:[#allocation5 + $0x58] sm:$0xff]
    %v57 = vld [vmem:[#allocation5 + $0x60] sm:$0xff]
    %v58 = vld [vmem:[#allocation5 + $0x68] sm:$0xff]
    %v59 = vld [vmem:[#allocation5 + $0x70] sm:$0xff]
    %v60 = vld [vmem:[#allocation5 + $0x78] sm:$0xff]
    %v61 = vld [vmem:[#allocation5 + $0x80] sm:$0xff]
    %v62 = vld [vmem:[#allocation5 + $0x88] sm:$0xff]
    %v63 = vld [vmem:[#allocation5 + $0x90] sm:$0xff]
    %v64 = vld [vmem:[#allocation5 + $0x98] sm:$0xff]
    %v65 = vld [vmem:[#allocation5 + $0xa0] sm:$0xff]
    %v66 = vld [vmem:[#allocation5 + $0xa8] sm:$0xff]
    %v67 = vld [vmem:[#allocation5 + $0xb0] sm:$0xff]
    %v68 = vld [vmem:[#allocation5 + $0xb8] sm:$0xff]
    %v69 = vld [vmem:[#allocation5 + $0xc0] sm:$0xff]
    %v70 = vld [vmem:[#allocation5 + $0xc8] sm:$0xff]
    %v71 = vld [vmem:[#allocation5 + $0xd0] sm:$0xff]
    %v72 = vld [vmem:[#allocation5 + $0xd8] sm:$0xff]
    %v73 = vld [vmem:[#allocation5 + $0xe0] sm:$0xff]
    %v74 = vld [vmem:[#allocation5 + $0xe8] sm:$0xff]
    %v75 = vld [vmem:[#allocation5 + $0xf0] sm:$0xff]
    %v76 = vld [vmem:[#allocation5 + $0xf8] sm:$0xff]
    %v77 = vld [vmem:[#allocation5 + $0x100] sm:$0xff]
    %v78 = vld [vmem:[#allocation5 + $0x108] sm:$0xff]
    %v79 = vld [vmem:[#allocation5 + $0x110] sm:$0xff]
    %v80 = vld [vmem:[#allocation5 + $0x118] sm:$0xff]
    %v81 = vld [vmem:[#allocation5 + $0x120] sm:$0xff]
    %v82 = vld [vmem:[#allocation5 + $0x128] sm:$0xff]
    %v83 = vld [vmem:[#allocation5 + $0x130] sm:$0xff]
    %v84 = vld [vmem:[#allocation5 + $0x138] sm:$0xff]
    %v85 = vld [vmem:[#allocation5 + $0x140] sm:$0xff]
    %v86 = vld [vmem:[#allocation5 + $0x148] sm:$0xff]
    %v87 = vld [vmem:[#allocation5 + $0x150] sm:$0xff]
    %v88 = vld [vmem:[#allocation5 + $0x158] sm:$0xff]
    %v89 = vld [vmem:[#allocation5 + $0x160] sm:$0xff]
    %v90 = vld [vmem:[#allocation5 + $0x168] sm:$0xff]
    %v91 = vld [vmem:[#allocation5 + $0x170] sm:$0xff]
    %v92 = vld [vmem:[#allocation5 + $0x178] sm:$0xff]
    %v93 = vld [vmem:[#allocation5 + $0x180] sm:$0xff]
    %v94 = vld [vmem:[#allocation5 + $0x188] sm:$0xff]
    %v95 = vld [vmem:[%s2] sm:$0x1]
    %v97 = vlaneseq
    %v98 = vshrl.u32 %v97, 7
    %v99 = vsub.s32 0, %v98
    %v100 = vrot.slane %v95, %v99
    %vm102 = vcmask 130048
    %v104 = vsel %vm102, %v44, 0
    %106 = vmatprep.subr.mxu0 0.0
    %107 = vmatpush1.msra.mxu0 %v60
    %108 = vmatprep.subr.mxu0 0.0
    %109 = vmatpush1.msra.mxu0 %v59
    %110 = vmatprep.subr.mxu0 0.0
    %111 = vmatpush1.msra.mxu0 %v58
    %112 = vmatprep.subr.mxu0 0.0
    %113 = vmatpush1.msra.mxu0 %v57
    %114 = vmatprep.subr.mxu0 0.0
    %115 = vmatpush1.msra.mxu0 %v56
    %116 = vmatprep.subr.mxu0 0.0
    %117 = vmatpush1.msra.mxu0 %v55
    %118 = vmatprep.subr.mxu0 0.0
    %119 = vmatpush1.msra.mxu0 %v54
    %120 = vmatprep.subr.mxu0 0.0
    %121 = vmatpush1.msra.mxu0 %v53
    %122 = vmatprep.subr.mxu0 0.0
    %123 = vmatpush1.msra.mxu0 %v52
    %124 = vmatprep.subr.mxu0 0.0
    %125 = vmatpush1.msra.mxu0 %v51
    %126 = vmatprep.subr.mxu0 0.0
    %127 = vmatpush1.msra.mxu0 %v50
    %128 = vmatprep.subr.mxu0 0.0
    %129 = vmatpush1.msra.mxu0 %v49
    %130 = vmatprep.subr.mxu0 0.0
    %131 = vmatpush1.msra.mxu0 %v48
    %132 = vmatprep.subr.mxu0 0.0
    %133 = vmatpush1.msra.mxu0 %v47
    %134 = vmatprep.subr.mxu0 0.0
    %135 = vmatpush1.msra.mxu0 %v46
    %136 = vmatprep.subr.mxu0 0.0
    %137 = vmatpush1.msra.mxu0 %v45
    %138 = vmatprep.subr.mxu0 0.0
    %139 = vmatpush2.msra.mxu0 %v76
    %140 = vmatprep.subr.mxu0 0.0
    %141 = vmatpush2.msra.mxu0 %v75
    %142 = vmatprep.subr.mxu0 0.0
    %143 = vmatpush2.msra.mxu0 %v74
    %144 = vmatprep.subr.mxu0 0.0
    %145 = vmatpush2.msra.mxu0 %v73
    %146 = vmatprep.subr.mxu0 0.0
    %147 = vmatpush2.msra.mxu0 %v72
    %148 = vmatprep.subr.mxu0 0.0
    %149 = vmatpush2.msra.mxu0 %v71
    %150 = vmatprep.subr.mxu0 0.0
    %151 = vmatpush2.msra.mxu0 %v70
    %152 = vmatprep.subr.mxu0 0.0
    %153 = vmatpush2.msra.mxu0 %v69
    %154 = vmatprep.subr.mxu0 0.0
    %155 = vmatpush2.msra.mxu0 %v68
    %156 = vmatprep.subr.mxu0 0.0
    %157 = vmatpush2.msra.mxu0 %v67
    %158 = vmatprep.subr.mxu0 0.0
    %159 = vmatpush2.msra.mxu0 %v66
    %160 = vmatprep.subr.mxu0 0.0
    %161 = vmatpush2.msra.mxu0 %v65
    %162 = vmatprep.subr.mxu0 0.0
    %163 = vmatpush2.msra.mxu0 %v64
    %164 = vmatprep.subr.mxu0 0.0
    %165 = vmatpush2.msra.mxu0 %v63
    %166 = vmatprep.subr.mxu0 0.0
    %167 = vmatpush2.msra.mxu0 %v62
    %168 = vmatprep.subr.mxu0 0.0
    %169 = vmatpush2.msra.mxu0 %v61
    %170 = vmatprep.mubr.f32.mxu0 %v42
    %171 = vmatmul.mubr.f32.gmra.mxu0 %v41
    %v172 = vpop.f32.mrf.mxu0
    %v173 = vadd.f32 %v100, %v172
    %v174 = vpop.f32.mrf.mxu0
    %175 = vdwg.mxu0
    %176 = vmatprep.subr.mxu0 0.0
    %177 = vmatpush1.msra.mxu0 %v92
    %178 = vmatprep.subr.mxu0 0.0
    %179 = vmatpush1.msra.mxu0 %v91
    %180 = vmatprep.subr.mxu0 0.0
    %181 = vmatpush1.msra.mxu0 %v90
    %182 = vmatprep.subr.mxu0 0.0
    %183 = vmatpush1.msra.mxu0 %v89
    %184 = vmatprep.subr.mxu0 0.0
    %185 = vmatpush1.msra.mxu0 %v88
    %186 = vmatprep.subr.mxu0 0.0
    %187 = vmatpush1.msra.mxu0 %v87
    %188 = vmatprep.subr.mxu0 0.0
    %189 = vmatpush1.msra.mxu0 %v86
    %190 = vmatprep.subr.mxu0 0.0
    %191 = vmatpush1.msra.mxu0 %v85
    %192 = vmatprep.subr.mxu0 0.0
    %193 = vmatpush1.msra.mxu0 %v84
    %194 = vmatprep.subr.mxu0 0.0
    %195 = vmatpush1.msra.mxu0 %v83
    %196 = vmatprep.subr.mxu0 0.0
    %197 = vmatpush1.msra.mxu0 %v82
    %198 = vmatprep.subr.mxu0 0.0
    %199 = vmatpush1.msra.mxu0 %v81
    %200 = vmatprep.subr.mxu0 0.0
    %201 = vmatpush1.msra.mxu0 %v80
    %202 = vmatprep.subr.mxu0 0.0
    %203 = vmatpush1.msra.mxu0 %v79
    %204 = vmatprep.subr.mxu0 0.0
    %205 = vmatpush1.msra.mxu0 %v78
    %206 = vmatprep.subr.mxu0 0.0
    %207 = vmatpush1.msra.mxu0 %v77
    %208 = vmatprep.subr.mxu0 0.0
    %209 = vmatpush2.msra.mxu0 0.0
    %210 = vmatprep.subr.mxu0 0.0
    %211 = vmatpush2.msra.mxu0 0.0
    %212 = vmatprep.subr.mxu0 0.0
    %213 = vmatpush2.msra.mxu0 0.0
    %214 = vmatprep.subr.mxu0 0.0
    %215 = vmatpush2.msra.mxu0 0.0
    %216 = vmatprep.subr.mxu0 0.0
    %217 = vmatpush2.msra.mxu0 0.0
    %218 = vmatprep.subr.mxu0 0.0
    %219 = vmatpush2.msra.mxu0 0.0
    %220 = vmatprep.subr.mxu0 0.0
    %221 = vmatpush2.msra.mxu0 0.0
    %222 = vmatprep.subr.mxu0 0.0
    %223 = vmatpush2.msra.mxu0 0.0
    %224 = vmatprep.subr.mxu0 0.0
    %225 = vmatpush2.msra.mxu0 0.0
    %226 = vmatprep.subr.mxu0 0.0
    %227 = vmatpush2.msra.mxu0 0.0
    %228 = vmatprep.subr.mxu0 0.0
    %229 = vmatpush2.msra.mxu0 0.0
    %230 = vmatprep.subr.mxu0 0.0
    %231 = vmatpush2.msra.mxu0 0.0
    %232 = vmatprep.subr.mxu0 0.0
    %233 = vmatpush2.msra.mxu0 0.0
    %234 = vmatprep.subr.mxu0 0.0
    %235 = vmatpush2.msra.mxu0 0.0
    %236 = vmatprep.subr.mxu0 0.0
    %237 = vmatpush2.msra.mxu0 %v94
    %238 = vmatprep.subr.mxu0 0.0
    %239 = vmatpush2.msra.mxu0 %v93
    %240 = vmatprep.mubr.f32.mxu0 %v104
    %241 = vmatmul.mubr.f32.gmra.mxu0 %v43
    %v242 = vpop.f32.mrf.mxu0
    %v243 = vadd.f32 %v173, %v242
    %v244 = vpop.f32.mrf.mxu0
    %245 = vdwg.mxu0
    %v246 = vmax.f32 %v243, 0.0
    %247 = vst [vmem:[#allocation7] sm:$0xff] %v246
    // Predicated region
    $region22: #{tpu_custom_call.1} parent=1 // pred_check
      _
    $region23: #{tpu_custom_call.1} parent=1 // pred_check_branch
      %249 = sbr.rel (0) target = $region25
    $region24: #{tpu_custom_call.1} parent=1 // pred_region
      %s251 = ssub.s32 128, 128
      %252 = vsyncadd [#allocation4], %s251
      %s254 = sshll.u32 [#allocation7], 4
      %s255 = int_to_ptr.vmem [resolvable:$true] %s254
      %257 = dma.vmem_to_hbm [thread:$0]  %s255, 128, %s3, [#allocation4]
    $region25: #{tpu_custom_call.1} parent=1 // pred_fallthru
      _
    // Predicated region
    $region26: #{tpu_custom_call.1} parent=1 // pred_check
      _
    $region27: #{tpu_custom_call.1} parent=1 // pred_check_branch
      %259 = sbr.rel (0) target = $region29
    $region28: #{tpu_custom_call.1} parent=1 // pred_region
      %260 = dma.done [#allocation4], 128
    $region29: #{tpu_custom_call.1} parent=1 // pred_fallthru
      _
    %261 = vsyncpa [#allocation3], 1
    %262 = vsyncpa [#allocation6], 1
    %263 = vsyncpa [#allocation4], 1

</llo_original>
